<compile_context>
chip_gen: v6e
topology: v6e:2x2x1
jax: 0.10.0
libtpu: 0.0.40
codegen_flags: <defaults>
</compile_context>

<pallas_src>
import functools

import jax
import jax.numpy as jnp
from jax.experimental import pallas as pl
from jax.experimental.pallas import tpu as pltpu


# ---------------------------------------------------------------------------
# helpers
# ---------------------------------------------------------------------------

def _round_up(x, m):
    return (x + m - 1) // m * m


def _pad_cols(a, to_cols):
    pad = to_cols - a.shape[1]
    return a if pad == 0 else jnp.pad(a, ((0, 0), (0, pad)))


def _vmem_estimate_bytes(*shapes):
    total = 0
    for s in shapes:
        n = 1
        for d in s:
            n *= d
        total += n * 4
    return total * 2  # rough double-buffering headroom


# ---------------------------------------------------------------------------
# small-N fast path: both tables fused in a single launch / single block
# ---------------------------------------------------------------------------

def _fused_encoder_kernel(xn_ref, wn_ref, gn_ref, bn_ref,
                          xe_ref, we_ref, ge_ref, be_ref,
                          on_ref, oe_ref, *, eps, matmul_dtype):
    def lin_bn(x_ref, w_ref, g_ref, b_ref, o_ref):
        y = jnp.dot(x_ref[...].astype(matmul_dtype),
                    w_ref[...].astype(matmul_dtype),
                    preferred_element_type=jnp.float32)            # [N, F_pad]
        # Linear bias intentionally omitted: it is exactly cancelled by the
        # batch-mean subtraction below (training-mode BatchNorm1d).
        mean = jnp.mean(y, axis=0, keepdims=True)                  # [1, F_pad]
        centered = y - mean
        var = jnp.mean(centered * centered, axis=0, keepdims=True) # biased var
        scale = g_ref[...] * jax.lax.rsqrt(var + eps)              # [1, F_pad] only
        o_ref[...] = (centered * scale + b_ref[...]).astype(o_ref.dtype)

    lin_bn(xn_ref, wn_ref, gn_ref, bn_ref, on_ref)
    lin_bn(xe_ref, we_ref, ge_ref, be_ref, oe_ref)


def _fused_small_path(xn, wn, gn, bn, xe, we, ge, be, *, eps, matmul_dtype):
    n_nodes = xn.shape[0]
    n_edges = xe.shape[0]
    f_pad = wn.shape[1]
    kernel = functools.partial(_fused_encoder_kernel, eps=eps,
                               matmul_dtype=matmul_dtype)
    full = lambda shape: pl.BlockSpec(shape, lambda i: (0, 0))
    return pl.pallas_call(
        kernel,
        out_shape=(jax.ShapeDtypeStruct((n_nodes, f_pad), jnp.float32),
                   jax.ShapeDtypeStruct((n_edges, f_pad), jnp.float32)),
        grid=(1,),
        in_specs=[full(xn.shape), full(wn.shape), full(gn.shape), full(bn.shape),
                  full(xe.shape), full(we.shape), full(ge.shape), full(be.shape)],
        out_specs=(full((n_nodes, f_pad)), full((n_edges, f_pad))),
        compiler_params=pltpu.CompilerParams(
            dimension_semantics=("arbitrary",)),
    )(xn, wn, gn, bn, xe, we, ge, be)


# ---------------------------------------------------------------------------
# large-N path: row-tiled, two-phase batch-norm (sum / sum-of-squares scratch)
# ---------------------------------------------------------------------------

def _tiled_linear_bn_kernel(x_ref, w_ref, g_ref, b_ref, o_ref,
                            sum_ref, sq_ref, *, eps, n_rows, matmul_dtype):
    p = pl.program_id(0)   # phase: 0 = accumulate stats, 1 = normalize
    i = pl.program_id(1)   # row tile

    y = jnp.dot(x_ref[...].astype(matmul_dtype),
                w_ref[...].astype(matmul_dtype),
                preferred_element_type=jnp.float32)                # [T, F_pad]

    @pl.when(jnp.logical_and(p == 0, i == 0))
    def _():
        sum_ref[...] = jnp.zeros_like(sum_ref)
        sq_ref[...] = jnp.zeros_like(sq_ref)

    @pl.when(p == 0)
    def _():
        # Padded (zero) rows contribute exactly 0 to both sums because the
        # Linear bias is dropped, so statistics only need division by true N.
        sum_ref[...] += jnp.sum(y, axis=0, keepdims=True)
        sq_ref[...] += jnp.sum(y * y, axis=0, keepdims=True)
        o_ref[...] = y.astype(o_ref.dtype)     # deterministic placeholder write

    @pl.when(p == 1)
    def _():
        inv_n = 1.0 / n_rows
        mean = sum_ref[...] * inv_n
        var = sq_ref[...] * inv_n - mean * mean                    # biased var, f32
        scale = g_ref[...] * jax.lax.rsqrt(var + eps)              # [1, F_pad]
        shift = b_ref[...] - mean * scale
        o_ref[...] = (y * scale + shift).astype(o_ref.dtype)


def _linear_bn_tiled(x, w, gamma, beta, *, eps, tile_rows, matmul_dtype):
    n, f_in = x.shape
    f_pad = w.shape[1]
    n_pad = _round_up(n, tile_rows)
    if n_pad != n:
        x = jnp.pad(x, ((0, n_pad - n), (0, 0)))
    num_tiles = n_pad // tile_rows

    kernel = functools.partial(_tiled_linear_bn_kernel, eps=eps,
                               n_rows=float(n), matmul_dtype=matmul_dtype)
    out = pl.pallas_call(
        kernel,
        out_shape=jax.ShapeDtypeStruct((n_pad, f_pad), jnp.float32),
        grid=(2, num_tiles),
        in_specs=[
            pl.BlockSpec((tile_rows, f_in), lambda p, i: (i, 0)),
            pl.BlockSpec((f_in, f_pad), lambda p, i: (0, 0)),
            pl.BlockSpec((1, f_pad), lambda p, i: (0, 0)),
            pl.BlockSpec((1, f_pad), lambda p, i: (0, 0)),
        ],
        out_specs=pl.BlockSpec((tile_rows, f_pad), lambda p, i: (i, 0)),
        scratch_shapes=[pltpu.VMEM((1, f_pad), jnp.float32),
                        pltpu.VMEM((1, f_pad), jnp.float32)],
        # Both axes are 'arbitrary': phase 1 depends on the full phase-0
        # reduction and the stats scratch is accumulated sequentially.
        compiler_params=pltpu.CompilerParams(
            dimension_semantics=("arbitrary", "arbitrary")),
    )(x, w, gamma, beta)
    return out[:n]


# ---------------------------------------------------------------------------
# parameters + forward
# ---------------------------------------------------------------------------

class FeatureEncoderParams:
    """Deterministic parameter init matching the module's __init__ shapes."""

    def __init__(self, key, dim_in_node, dim_in_edge, dim_inner):
        k = jax.random.split(key, 4)
        # Node encoder: Linear(dim_in_node -> dim_inner)
        self.node_w = (jax.random.normal(k[0], (dim_in_node, dim_inner), jnp.float32)
                       * (1.0 / jnp.sqrt(dim_in_node)))
        self.node_b = jax.random.normal(k[1], (1, dim_inner), jnp.float32) * 0.01
        # BatchNorm1d(dim_inner): PyTorch default init gamma=1, beta=0
        self.node_gamma = jnp.ones((1, dim_inner), jnp.float32)
        self.node_beta = jnp.zeros((1, dim_inner), jnp.float32)
        # Edge encoder: Linear(dim_in_edge -> dim_edge == dim_inner, non-PNA)
        self.edge_w = (jax.random.normal(k[2], (dim_in_edge, dim_inner), jnp.float32)
                       * (1.0 / jnp.sqrt(dim_in_edge)))
        self.edge_b = jax.random.normal(k[3], (1, dim_inner), jnp.float32) * 0.01
        self.edge_gamma = jnp.ones((1, dim_inner), jnp.float32)
        self.edge_beta = jnp.zeros((1, dim_inner), jnp.float32)


def feature_encoder_forward(params, x, edge_attr, *, eps=1e-5,
                            matmul_dtype=jnp.float32,   # bf16 worthwhile at production widths
                            tile_rows=512,
                            force_tiled=False,
                            small_path_vmem_budget=16 * 1024 * 1024):
    """Applies node_encoder -> node_encoder_bn and edge_encoder -> edge_encoder_bn."""
    dim_inner = params.node_w.shape[1]
    f_pad = _round_up(dim_inner, 128)   # lane-dense output width

    node_w = _pad_cols(params.node_w, f_pad)
    node_g = _pad_cols(params.node_gamma, f_pad)
    node_b = _pad_cols(params.node_beta, f_pad)
    edge_w = _pad_cols(params.edge_w, f_pad)
    edge_g = _pad_cols(params.edge_gamma, f_pad)
    edge_b = _pad_cols(params.edge_beta, f_pad)

    small_bytes = _vmem_estimate_bytes(
        x.shape, node_w.shape, node_g.shape, node_b.shape, (x.shape[0], f_pad),
        edge_attr.shape, edge_w.shape, edge_g.shape, edge_b.shape,
        (edge_attr.shape[0], f_pad))

    if (not force_tiled) and small_bytes <= small_path_vmem_budget:
        # Both tables fit comfortably in VMEM -> one fused launch.
        x_out, e_out = _fused_small_path(
            x, node_w, node_g, node_b,
            edge_attr, edge_w, edge_g, edge_b,
            eps=eps, matmul_dtype=matmul_dtype)
    else:
        # Realistic graph batches: row-tiled, pipelined, per-table calls.
        x_out = _linear_bn_tiled(x, node_w, node_g, node_b, eps=eps,
                                 tile_rows=tile_rows, matmul_dtype=matmul_dtype)
        e_out = _linear_bn_tiled(edge_attr, edge_w, edge_g, edge_b, eps=eps,
                                 tile_rows=tile_rows, matmul_dtype=matmul_dtype)
    return x_out[:, :dim_inner], e_out[:, :dim_inner]


# ---------------------------------------------------------------------------
# pure-JAX reference (bias included -- mathematically cancelled by the BN mean)
# ---------------------------------------------------------------------------

def _reference(params, x, edge_attr, eps=1e-5):
    def lin_bn(x, w, b, g, bt):
        y = x @ w + b
        mu = y.mean(0, keepdims=True)
        var = ((y - mu) ** 2).mean(0, keepdims=True)
        return g * (y - mu) / jnp.sqrt(var + eps) + bt
    return (lin_bn(x, params.node_w, params.node_b, params.node_gamma, params.node_beta),
            lin_bn(edge_attr, params.edge_w, params.edge_b, params.edge_gamma, params.edge_beta))


# TODO(synk): BatchNorm1d running_mean / running_var buffer updates (eval-mode
# statistics) are not produced; this matches the training-mode forward only.

if __name__ == "__main__":
    key = jax.random.PRNGKey(0)
    k_param, k_x, k_e = jax.random.split(key, 3)

    # Small graph-batch shapes.
    num_nodes, dim_in_node = 64, 16
    num_edges, dim_in_edge = 128, 8
    dim_inner = 32   # cfg.gnn.dim_inner

    params = FeatureEncoderParams(k_param, dim_in_node, dim_in_edge, dim_inner)
    x = jax.random.normal(k_x, (num_nodes, dim_in_node), jnp.float32)
    edge_attr = jax.random.normal(k_e, (num_edges, dim_in_edge), jnp.float32)

    x_ref, e_ref = _reference(params, x, edge_attr)

    # 1) Fused single-launch fast path (default for small tables).
    x_out, e_out = feature_encoder_forward(params, x, edge_attr)
    jax.block_until_ready((x_out, e_out))
    assert x_out.shape == (num_nodes, dim_inner)
    assert e_out.shape == (num_edges, dim_inner)
    assert jnp.allclose(x_out, x_ref, atol=1e-3, rtol=1e-3), "node path mismatch (fused)"
    assert jnp.allclose(e_out, e_ref, atol=1e-3, rtol=1e-3), "edge path mismatch (fused)"

    # 2) Row-tiled two-phase path, forced with a small tile so multiple row
    #    blocks and the row-padding branch (64->96, 128->144 rows) are exercised.
    x_out_t, e_out_t = feature_encoder_forward(params, x, edge_attr,
                                               force_tiled=True, tile_rows=48)
    jax.block_until_ready((x_out_t, e_out_t))
    assert jnp.allclose(x_out_t, x_ref, atol=1e-3, rtol=1e-3), "node path mismatch (tiled)"
    assert jnp.allclose(e_out_t, e_ref, atol=1e-3, rtol=1e-3), "edge path mismatch (tiled)"

    print("KERNEL_OK")
</pallas_src>

<mosaic_0001>
module attributes {stable_mosaic.version = 11 : i64} {
  func.func @_fused_encoder_kernel(%arg0: i32, %arg1: memref<64x16xf32, #tpu.memory_space<vmem>>, %arg2: memref<16x128xf32, #tpu.memory_space<vmem>>, %arg3: memref<1x128xf32, #tpu.memory_space<vmem>>, %arg4: memref<1x128xf32, #tpu.memory_space<vmem>>, %arg5: memref<128x8xf32, #tpu.memory_space<vmem>>, %arg6: memref<8x128xf32, #tpu.memory_space<vmem>>, %arg7: memref<1x128xf32, #tpu.memory_space<vmem>>, %arg8: memref<1x128xf32, #tpu.memory_space<vmem>>, %arg9: memref<64x128xf32, #tpu.memory_space<vmem>>, %arg10: memref<128x128xf32, #tpu.memory_space<vmem>>) attributes {dimension_semantics = [#tpu.dimension_semantics<arbitrary>], iteration_bounds = array<i64: 1>, scalar_prefetch = 0 : i64, scratch_operands = 0 : i64, tpu.core_type = #tpu.core_type<tc>, window_params = [{pipeline_mode = #tpu.pipeline_mode<synchronous>, transform_indices = @transform_0, window_bounds = array<i64: 64, 16>}, {pipeline_mode = #tpu.pipeline_mode<synchronous>, transform_indices = @transform_1, window_bounds = array<i64: 16, 128>}, {pipeline_mode = #tpu.pipeline_mode<synchronous>, transform_indices = @transform_2, window_bounds = array<i64: 1, 128>}, {pipeline_mode = #tpu.pipeline_mode<synchronous>, transform_indices = @transform_3, window_bounds = array<i64: 1, 128>}, {pipeline_mode = #tpu.pipeline_mode<synchronous>, transform_indices = @transform_4, window_bounds = array<i64: 128, 8>}, {pipeline_mode = #tpu.pipeline_mode<synchronous>, transform_indices = @transform_5, window_bounds = array<i64: 8, 128>}, {pipeline_mode = #tpu.pipeline_mode<synchronous>, transform_indices = @transform_6, window_bounds = array<i64: 1, 128>}, {pipeline_mode = #tpu.pipeline_mode<synchronous>, transform_indices = @transform_7, window_bounds = array<i64: 1, 128>}, {pipeline_mode = #tpu.pipeline_mode<synchronous>, transform_indices = @transform_8, window_bounds = array<i64: 64, 128>}, {pipeline_mode = #tpu.pipeline_mode<synchronous>, transform_indices = @transform_9, window_bounds = array<i64: 128, 128>}]} {
    %c0 = arith.constant 0 : index
    %c0_0 = arith.constant 0 : index
    %0 = vector.load %arg1[%c0, %c0_0] : memref<64x16xf32, #tpu.memory_space<vmem>>, vector<64x16xf32>
    %c0_1 = arith.constant 0 : index
    %c0_2 = arith.constant 0 : index
    %1 = vector.load %arg2[%c0_1, %c0_2] : memref<16x128xf32, #tpu.memory_space<vmem>>, vector<16x128xf32>
    %cst = arith.constant dense<0.000000e+00> : vector<64x128xf32>
    %2 = tpu.matmul %0, %1, %cst {dimension_numbers = #tpu.dot_dimension_numbers<[1], [0], [0], [1], [0, 0, 1, 1], [], []>} : vector<64x16xf32>, vector<16x128xf32>, vector<64x128xf32> -> vector<64x128xf32>
    %cst_3 = arith.constant dense<0.000000e+00> : vector<128xf32>
    %3 = vector.multi_reduction <add>, %2, %cst_3 [0] : vector<64x128xf32> to vector<128xf32>
    %4 = vector.shape_cast %3 : vector<128xf32> to vector<1x128xf32>
    %cst_4 = arith.constant 6.400000e+01 : f32
    %5 = vector.broadcast %cst_4 : f32 to vector<1x128xf32>
    %6 = arith.divf %4, %5 : vector<1x128xf32>
    %7 = vector.broadcast %6 : vector<1x128xf32> to vector<64x128xf32>
    %8 = arith.subf %2, %7 : vector<64x128xf32>
    %9 = arith.mulf %8, %8 : vector<64x128xf32>
    %cst_5 = arith.constant dense<0.000000e+00> : vector<128xf32>
    %10 = vector.multi_reduction <add>, %9, %cst_5 [0] : vector<64x128xf32> to vector<128xf32>
    %11 = vector.shape_cast %10 : vector<128xf32> to vector<1x128xf32>
    %cst_6 = arith.constant 6.400000e+01 : f32
    %12 = vector.broadcast %cst_6 : f32 to vector<1x128xf32>
    %13 = arith.divf %11, %12 : vector<1x128xf32>
    %c0_7 = arith.constant 0 : index
    %c0_8 = arith.constant 0 : index
    %14 = vector.load %arg3[%c0_7, %c0_8] : memref<1x128xf32, #tpu.memory_space<vmem>>, vector<1x128xf32>
    %cst_9 = arith.constant 9.99999974E-6 : f32
    %15 = vector.broadcast %cst_9 : f32 to vector<1x128xf32>
    %16 = arith.addf %13, %15 : vector<1x128xf32>
    %17 = math.rsqrt %16 : vector<1x128xf32>
    %18 = arith.mulf %14, %17 : vector<1x128xf32>
    %19 = vector.broadcast %18 : vector<1x128xf32> to vector<64x128xf32>
    %20 = arith.mulf %8, %19 : vector<64x128xf32>
    %c0_10 = arith.constant 0 : index
    %c0_11 = arith.constant 0 : index
    %21 = vector.load %arg4[%c0_10, %c0_11] : memref<1x128xf32, #tpu.memory_space<vmem>>, vector<1x128xf32>
    %22 = vector.broadcast %21 : vector<1x128xf32> to vector<64x128xf32>
    %23 = arith.addf %20, %22 : vector<64x128xf32>
    %c0_12 = arith.constant 0 : index
    %c0_13 = arith.constant 0 : index
    %24 = vector.load %arg9[%c0_12, %c0_13] : memref<64x128xf32, #tpu.memory_space<vmem>>, vector<64x128xf32>
    tpu.vector_store %arg9[%c0_12, %c0_13], %23 {strides = array<i32>} : memref<64x128xf32, #tpu.memory_space<vmem>>, vector<64x128xf32>,
    %c0_14 = arith.constant 0 : index
    %c0_15 = arith.constant 0 : index
    %25 = vector.load %arg5[%c0_14, %c0_15] : memref<128x8xf32, #tpu.memory_space<vmem>>, vector<128x8xf32>
    %c0_16 = arith.constant 0 : index
    %c0_17 = arith.constant 0 : index
    %26 = vector.load %arg6[%c0_16, %c0_17] : memref<8x128xf32, #tpu.memory_space<vmem>>, vector<8x128xf32>
    %cst_18 = arith.constant dense<0.000000e+00> : vector<128x128xf32>
    %27 = tpu.matmul %25, %26, %cst_18 {dimension_numbers = #tpu.dot_dimension_numbers<[1], [0], [0], [1], [0, 0, 1, 1], [], []>} : vector<128x8xf32>, vector<8x128xf32>, vector<128x128xf32> -> vector<128x128xf32>
    %cst_19 = arith.constant dense<0.000000e+00> : vector<128xf32>
    %28 = vector.multi_reduction <add>, %27, %cst_19 [0] : vector<128x128xf32> to vector<128xf32>
    %29 = vector.shape_cast %28 : vector<128xf32> to vector<1x128xf32>
    %cst_20 = arith.constant 1.280000e+02 : f32
    %30 = vector.broadcast %cst_20 : f32 to vector<1x128xf32>
    %31 = arith.divf %29, %30 : vector<1x128xf32>
    %32 = vector.broadcast %31 : vector<1x128xf32> to vector<128x128xf32>
    %33 = arith.subf %27, %32 : vector<128x128xf32>
    %34 = arith.mulf %33, %33 : vector<128x128xf32>
    %cst_21 = arith.constant dense<0.000000e+00> : vector<128xf32>
    %35 = vector.multi_reduction <add>, %34, %cst_21 [0] : vector<128x128xf32> to vector<128xf32>
    %36 = vector.shape_cast %35 : vector<128xf32> to vector<1x128xf32>
    %cst_22 = arith.constant 1.280000e+02 : f32
    %37 = vector.broadcast %cst_22 : f32 to vector<1x128xf32>
    %38 = arith.divf %36, %37 : vector<1x128xf32>
    %c0_23 = arith.constant 0 : index
    %c0_24 = arith.constant 0 : index
    %39 = vector.load %arg7[%c0_23, %c0_24] : memref<1x128xf32, #tpu.memory_space<vmem>>, vector<1x128xf32>
    %cst_25 = arith.constant 9.99999974E-6 : f32
    %40 = vector.broadcast %cst_25 : f32 to vector<1x128xf32>
    %41 = arith.addf %38, %40 : vector<1x128xf32>
    %42 = math.rsqrt %41 : vector<1x128xf32>
    %43 = arith.mulf %39, %42 : vector<1x128xf32>
    %44 = vector.broadcast %43 : vector<1x128xf32> to vector<128x128xf32>
    %45 = arith.mulf %33, %44 : vector<128x128xf32>
    %c0_26 = arith.constant 0 : index
    %c0_27 = arith.constant 0 : index
    %46 = vector.load %arg8[%c0_26, %c0_27] : memref<1x128xf32, #tpu.memory_space<vmem>>, vector<1x128xf32>
    %47 = vector.broadcast %46 : vector<1x128xf32> to vector<128x128xf32>
    %48 = arith.addf %45, %47 : vector<128x128xf32>
    %c0_28 = arith.constant 0 : index
    %c0_29 = arith.constant 0 : index
    %49 = vector.load %arg10[%c0_28, %c0_29] : memref<128x128xf32, #tpu.memory_space<vmem>>, vector<128x128xf32>
    tpu.vector_store %arg10[%c0_28, %c0_29], %48 {strides = array<i32>} : memref<128x128xf32, #tpu.memory_space<vmem>>, vector<128x128xf32>,
    return
  }
  func.func @transform_0(%arg0: i32) -> (i32, i32) {
    %c0_i32 = arith.constant 0 : i32
    %c0_i32_0 = arith.constant 0 : i32
    %c0_i32_1 = arith.constant 0 : i32
    return %c0_i32, %c0_i32_0 : i32, i32
  }
  func.func @transform_1(%arg0: i32) -> (i32, i32) {
    %c0_i32 = arith.constant 0 : i32
    %c0_i32_0 = arith.constant 0 : i32
    %c0_i32_1 = arith.constant 0 : i32
    return %c0_i32, %c0_i32_0 : i32, i32
  }
  func.func @transform_2(%arg0: i32) -> (i32, i32) {
    %c0_i32 = arith.constant 0 : i32
    %c0_i32_0 = arith.constant 0 : i32
    %c0_i32_1 = arith.constant 0 : i32
    return %c0_i32, %c0_i32_0 : i32, i32
  }
  func.func @transform_3(%arg0: i32) -> (i32, i32) {
    %c0_i32 = arith.constant 0 : i32
    %c0_i32_0 = arith.constant 0 : i32
    %c0_i32_1 = arith.constant 0 : i32
    return %c0_i32, %c0_i32_0 : i32, i32
  }
  func.func @transform_4(%arg0: i32) -> (i32, i32) {
    %c0_i32 = arith.constant 0 : i32
    %c0_i32_0 = arith.constant 0 : i32
    %c0_i32_1 = arith.constant 0 : i32
    return %c0_i32, %c0_i32_0 : i32, i32
  }
  func.func @transform_5(%arg0: i32) -> (i32, i32) {
    %c0_i32 = arith.constant 0 : i32
    %c0_i32_0 = arith.constant 0 : i32
    %c0_i32_1 = arith.constant 0 : i32
    return %c0_i32, %c0_i32_0 : i32, i32
  }
  func.func @transform_6(%arg0: i32) -> (i32, i32) {
    %c0_i32 = arith.constant 0 : i32
    %c0_i32_0 = arith.constant 0 : i32
    %c0_i32_1 = arith.constant 0 : i32
    return %c0_i32, %c0_i32_0 : i32, i32
  }
  func.func @transform_7(%arg0: i32) -> (i32, i32) {
    %c0_i32 = arith.constant 0 : i32
    %c0_i32_0 = arith.constant 0 : i32
    %c0_i32_1 = arith.constant 0 : i32
    return %c0_i32, %c0_i32_0 : i32, i32
  }
  func.func @transform_8(%arg0: i32) -> (i32, i32) {
    %c0_i32 = arith.constant 0 : i32
    %c0_i32_0 = arith.constant 0 : i32
    %c0_i32_1 = arith.constant 0 : i32
    return %c0_i32, %c0_i32_0 : i32, i32
  }
  func.func @transform_9(%arg0: i32) -> (i32, i32) {
    %c0_i32 = arith.constant 0 : i32
    %c0_i32_0 = arith.constant 0 : i32
    %c0_i32_1 = arith.constant 0 : i32
    return %c0_i32, %c0_i32_0 : i32, i32
  }
}

</mosaic_0001>

<llo_original>
// kernel: tpu_custom_call.1
$region0: #{tpu_custom_call.1}
  #allocation0 [shape = 'u32[]', space=smem, size = 0x4, offset = 0x4, fixed_abs, tag = 'smem constant byte address 0x4 - core index']
  #allocation1 [shape = 'u32[144,128]{1,0:T(1,128)}', space=vmem, size = 0x12000, scoped, tag = 'internal scratch']
  %s0 = inlined_call_operand.vmem [shape: f32[64,16], index: 0, kind: input, shape index: {}]
  %s1 = inlined_call_operand.vmem [shape: f32[16,128], index: 1, kind: input, shape index: {}]
  %s2 = inlined_call_operand.vmem [shape: f32[1,128], index: 2, kind: input, shape index: {}]
  %s3 = inlined_call_operand.vmem [shape: f32[1,128], index: 3, kind: input, shape index: {}]
  %s4 = inlined_call_operand.vmem [shape: f32[128,8], index: 4, kind: input, shape index: {}]
  %s5 = inlined_call_operand.vmem [shape: f32[8,128], index: 5, kind: input, shape index: {}]
  %s6 = inlined_call_operand.vmem [shape: f32[1,128], index: 6, kind: input, shape index: {}]
  %s7 = inlined_call_operand.vmem [shape: f32[1,128], index: 7, kind: input, shape index: {}]
  %s8 = inlined_call_operand.hbm [shape: f32[64,128], index: 8, kind: output, shape index: {0}]
  %s9 = inlined_call_operand.hbm [shape: f32[128,128], index: 9, kind: output, shape index: {1}]
  %10 = xla_tuple %s8, %s9
  %s11 = sld [smem:[#allocation0]]
  $region50: #{tpu_custom_call.1} parent=0
    _
  %s13 = ssub.s32 1, %s11
  %s14 = scalar_select 0, %s13, %s11
  $region1: #{tpu_custom_call.1} parent=0
    #allocation2 [shape = 'u8[32768]{0}', space=vmem, size = 0x8000, scoped, tag = 'output window, operand 0, single buffered']
    #allocation3 [shape = 's32[1]{0}', space=sflag, size = 0x4, scoped, tag = 'scoped memory for tpu_custom_call.1']
    #allocation4 [shape = 'u8[65536]{0}', space=vmem, size = 0x10000, scoped, tag = 'output window, operand 1, single buffered']
    #allocation5 [shape = 's32[1]{0}', space=sflag, size = 0x4, scoped, tag = 'scoped memory for tpu_custom_call.1']
    %15 = vsyncpa [#allocation3], 0
    %16 = vsyncpa [#allocation5], 0
    // Predicated region
    $region2: #{tpu_custom_call.1} parent=1 // pred_check
      _
    $region3: #{tpu_custom_call.1} parent=1 // pred_check_branch
      %18 = sbr.rel (0) target = $region5
    $region4: #{tpu_custom_call.1} parent=1 // pred_region
      _
    $region5: #{tpu_custom_call.1} parent=1 // pred_fallthru
      _
    // Predicated region
    $region6: #{tpu_custom_call.1} parent=1 // pred_check
      _
    $region7: #{tpu_custom_call.1} parent=1 // pred_check_branch
      %20 = sbr.rel (0) target = $region9
    $region8: #{tpu_custom_call.1} parent=1 // pred_region
      _
    $region9: #{tpu_custom_call.1} parent=1 // pred_fallthru
      _
    // Predicated region
    $region10: #{tpu_custom_call.1} parent=1 // pred_check
      _
    $region11: #{tpu_custom_call.1} parent=1 // pred_check_branch
      %22 = sbr.rel (0) target = $region13
    $region12: #{tpu_custom_call.1} parent=1 // pred_region
      _
    $region13: #{tpu_custom_call.1} parent=1 // pred_fallthru
      _
    // Predicated region
    $region14: #{tpu_custom_call.1} parent=1 // pred_check
      _
    $region15: #{tpu_custom_call.1} parent=1 // pred_check_branch
      %24 = sbr.rel (0) target = $region17
    $region16: #{tpu_custom_call.1} parent=1 // pred_region
      _
    $region17: #{tpu_custom_call.1} parent=1 // pred_fallthru
      _
    // Predicated region
    $region18: #{tpu_custom_call.1} parent=1 // pred_check
      _
    $region19: #{tpu_custom_call.1} parent=1 // pred_check_branch
      %26 = sbr.rel (0) target = $region21
    $region20: #{tpu_custom_call.1} parent=1 // pred_region
      _
    $region21: #{tpu_custom_call.1} parent=1 // pred_fallthru
      _
    // Predicated region
    $region22: #{tpu_custom_call.1} parent=1 // pred_check
      _
    $region23: #{tpu_custom_call.1} parent=1 // pred_check_branch
      %28 = sbr.rel (0) target = $region25
    $region24: #{tpu_custom_call.1} parent=1 // pred_region
      _
    $region25: #{tpu_custom_call.1} parent=1 // pred_fallthru
      _
    // Predicated region
    $region26: #{tpu_custom_call.1} parent=1 // pred_check
      _
    $region27: #{tpu_custom_call.1} parent=1 // pred_check_branch
      %30 = sbr.rel (0) target = $region29
    $region28: #{tpu_custom_call.1} parent=1 // pred_region
      _
    $region29: #{tpu_custom_call.1} parent=1 // pred_fallthru
      _
    // Predicated region
    $region30: #{tpu_custom_call.1} parent=1 // pred_check
      _
    $region31: #{tpu_custom_call.1} parent=1 // pred_check_branch
      %32 = sbr.rel (0) target = $region33
    $region32: #{tpu_custom_call.1} parent=1 // pred_region
      _
    $region33: #{tpu_custom_call.1} parent=1 // pred_fallthru
      _
    %v33 = vld [vmem:[%s0] sm:$0xff]
    %v34 = vld [vmem:[%s0 + $0x8] sm:$0xff]
    %v35 = vld [vmem:[%s0 + $0x10] sm:$0xff]
    %v36 = vld [vmem:[%s0 + $0x18] sm:$0xff]
    %v37 = vld [vmem:[%s0 + $0x20] sm:$0xff]
    %v38 = vld [vmem:[%s0 + $0x28] sm:$0xff]
    %v39 = vld [vmem:[%s0 + $0x30] sm:$0xff]
    %v40 = vld [vmem:[%s0 + $0x38] sm:$0xff]
    %v41 = vld [vmem:[%s1] sm:$0xff]
    %v42 = vld [vmem:[%s1 + $0x8] sm:$0xff]
    %vm43 = vcmask 130048
    %v45 = vsel %vm43, %v33, 0
    %v48 = vsel %vm43, %v34, 0
    %v51 = vsel %vm43, %v35, 0
    %v54 = vsel %vm43, %v36, 0
    %v57 = vsel %vm43, %v37, 0
    %v60 = vsel %vm43, %v38, 0
    %v63 = vsel %vm43, %v39, 0
    %v66 = vsel %vm43, %v40, 0
    %68 = vmatprep.subr.mxu0 0.0
    %69 = vmatpush1.msra.mxu0 0.0
    %70 = vmatprep.subr.mxu0 0.0
    %71 = vmatpush1.msra.mxu0 0.0
    %72 = vmatprep.subr.mxu0 0.0
    %73 = vmatpush1.msra.mxu0 0.0
    %74 = vmatprep.subr.mxu0 0.0
    %75 = vmatpush1.msra.mxu0 0.0
    %76 = vmatprep.subr.mxu0 0.0
    %77 = vmatpush1.msra.mxu0 0.0
    %78 = vmatprep.subr.mxu0 0.0
    %79 = vmatpush1.msra.mxu0 0.0
    %80 = vmatprep.subr.mxu0 0.0
    %81 = vmatpush1.msra.mxu0 0.0
    %82 = vmatprep.subr.mxu0 0.0
    %83 = vmatpush1.msra.mxu0 0.0
    %84 = vmatprep.subr.mxu0 0.0
    %85 = vmatpush1.msra.mxu0 0.0
    %86 = vmatprep.subr.mxu0 0.0
    %87 = vmatpush1.msra.mxu0 0.0
    %88 = vmatprep.subr.mxu0 0.0
    %89 = vmatpush1.msra.mxu0 0.0
    %90 = vmatprep.subr.mxu0 0.0
    %91 = vmatpush1.msra.mxu0 0.0
    %92 = vmatprep.subr.mxu0 0.0
    %93 = vmatpush1.msra.mxu0 0.0
    %94 = vmatprep.subr.mxu0 0.0
    %95 = vmatpush1.msra.mxu0 0.0
    %96 = vmatprep.subr.mxu0 0.0
    %97 = vmatpush1.msra.mxu0 %v42
    %98 = vmatprep.subr.mxu0 0.0
    %99 = vmatpush1.msra.mxu0 %v41
    %100 = vmatprep.subr.mxu0 0.0
    %101 = vmatpush2.msra.mxu0 0.0
    %102 = vmatprep.subr.mxu0 0.0
    %103 = vmatpush2.msra.mxu0 0.0
    %104 = vmatprep.subr.mxu0 0.0
    %105 = vmatpush2.msra.mxu0 0.0
    %106 = vmatprep.subr.mxu0 0.0
    %107 = vmatpush2.msra.mxu0 0.0
    %108 = vmatprep.subr.mxu0 0.0
    %109 = vmatpush2.msra.mxu0 0.0
    %110 = vmatprep.subr.mxu0 0.0
    %111 = vmatpush2.msra.mxu0 0.0
    %112 = vmatprep.subr.mxu0 0.0
    %113 = vmatpush2.msra.mxu0 0.0
    %114 = vmatprep.subr.mxu0 0.0
    %115 = vmatpush2.msra.mxu0 0.0
    %116 = vmatprep.subr.mxu0 0.0
    %117 = vmatpush2.msra.mxu0 0.0
    %118 = vmatprep.subr.mxu0 0.0
    %119 = vmatpush2.msra.mxu0 0.0
    %120 = vmatprep.subr.mxu0 0.0
    %121 = vmatpush2.msra.mxu0 0.0
    %122 = vmatprep.subr.mxu0 0.0
    %123 = vmatpush2.msra.mxu0 0.0
    %124 = vmatprep.subr.mxu0 0.0
    %125 = vmatpush2.msra.mxu0 0.0
    %126 = vmatprep.subr.mxu0 0.0
    %127 = vmatpush2.msra.mxu0 0.0
    %128 = vmatprep.subr.mxu0 0.0
    %129 = vmatpush2.msra.mxu0 0.0
    %130 = vmatprep.subr.mxu0 0.0
    %131 = vmatpush2.msra.mxu0 0.0
    %132 = vmatprep.mubr.f32.mxu0 0.0
    %133 = vmatmul.mubr.f32.gmra.mxu0 %v45
    %v134 = vpop.f32.mrf.mxu0
    %v135 = vadd.f32 0.0, %v134
    %v136 = vpop.f32.mrf.mxu0
    %137 = vmatprep.mubr.f32.mxu0 0.0
    %138 = vmatmul.mubr.f32.gmra.mxu0 %v48
    %v139 = vpop.f32.mrf.mxu0
    %v140 = vadd.f32 0.0, %v139
    %v141 = vpop.f32.mrf.mxu0
    %142 = vmatprep.mubr.f32.mxu0 0.0
    %143 = vmatmul.mubr.f32.gmra.mxu0 %v51
    %v144 = vpop.f32.mrf.mxu0
    %v145 = vadd.f32 0.0, %v144
    %v146 = vpop.f32.mrf.mxu0
    %147 = vmatprep.mubr.f32.mxu0 0.0
    %148 = vmatmul.mubr.f32.gmra.mxu0 %v54
    %v149 = vpop.f32.mrf.mxu0
    %v150 = vadd.f32 0.0, %v149
    %v151 = vpop.f32.mrf.mxu0
    %152 = vmatprep.mubr.f32.mxu0 0.0
    %153 = vmatmul.mubr.f32.gmra.mxu0 %v57
    %v154 = vpop.f32.mrf.mxu0
    %v155 = vadd.f32 0.0, %v154
    %v156 = vpop.f32.mrf.mxu0
    %157 = vmatprep.mubr.f32.mxu0 0.0
    %158 = vmatmul.mubr.f32.gmra.mxu0 %v60
    %v159 = vpop.f32.mrf.mxu0
    %v160 = vadd.f32 0.0, %v159
    %v161 = vpop.f32.mrf.mxu0
    %162 = vmatprep.mubr.f32.mxu0 0.0
    %163 = vmatmul.mubr.f32.gmra.mxu0 %v63
    %v164 = vpop.f32.mrf.mxu0
    %v165 = vadd.f32 0.0, %v164
    %v166 = vpop.f32.mrf.mxu0
    %167 = vmatprep.mubr.f32.mxu0 0.0
    %168 = vmatmul.mubr.f32.gmra.mxu0 %v66
    %v169 = vpop.f32.mrf.mxu0
    %v170 = vadd.f32 0.0, %v169
    %v171 = vpop.f32.mrf.mxu0
    %172 = vdwg.mxu0
    %v173 = vadd.f32 %v135, %v140
    %v174 = vadd.f32 %v173, %v145
    %v175 = vadd.f32 %v174, %v150
    %v176 = vadd.f32 %v175, %v155
    %v177 = vadd.f32 %v176, %v160
    %v178 = vadd.f32 %v177, %v165
    %v179 = vadd.f32 %v178, %v170
    %v180 = vrot.slane %v179, 4
    %v181 = vadd.f32 %v179, %v180
    %v182 = vrot.slane %v181, 2
    %v183 = vadd.f32 %v181, %v182
    %v184 = vrot.slane %v183, 1
    %v185 = vadd.f32 %v183, %v184
    %v186 = vrcp.pop 64.0
    %v187 = vmul.f32 %v185, %v186
    %v188 = vsub.f32 %v135, %v187
    %v189 = vsub.f32 %v140, %v187
    %v190 = vsub.f32 %v145, %v187
    %v191 = vsub.f32 %v150, %v187
    %v192 = vsub.f32 %v155, %v187
    %v193 = vsub.f32 %v160, %v187
    %v194 = vsub.f32 %v165, %v187
    %v195 = vsub.f32 %v170, %v187
    %v196 = vmul.f32 %v188, %v188
    %v197 = vmul.f32 %v189, %v189
    %v198 = vmul.f32 %v190, %v190
    %v199 = vmul.f32 %v191, %v191
    %v200 = vmul.f32 %v192, %v192
    %v201 = vmul.f32 %v193, %v193
    %v202 = vmul.f32 %v194, %v194
    %v203 = vmul.f32 %v195, %v195
    %v204 = vadd.f32 %v196, %v197
    %v205 = vadd.f32 %v204, %v198
    %v206 = vadd.f32 %v205, %v199
    %v207 = vadd.f32 %v206, %v200
    %v208 = vadd.f32 %v207, %v201
    %v209 = vadd.f32 %v208, %v202
    %v210 = vadd.f32 %v209, %v203
    %v211 = vrot.slane %v210, 4
    %v212 = vadd.f32 %v210, %v211
    %v213 = vrot.slane %v212, 2
    %v214 = vadd.f32 %v212, %v213
    %v215 = vrot.slane %v214, 1
    %v216 = vadd.f32 %v214, %v215
    %v217 = vmul.f32 %v216, %v186
    %v218 = vld [vmem:[%s2] sm:$0x1]
    %v219 = vadd.f32 %v217, 1e-05
    %v220 = vrsqrt.pop %v219
    %v221 = vmul.f32 %v218, %v220
    %v223 = vlaneseq
    %v224 = vshrl.u32 %v223, 7
    %v225 = vsub.s32 0, %v224
    %v226 = vrot.slane %v221, %v225
    %v228 = vmul.f32 %v188, %v226
    %v229 = vmul.f32 %v189, %v226
    %v230 = vmul.f32 %v190, %v226
    %v231 = vmul.f32 %v191, %v226
    %v232 = vmul.f32 %v192, %v226
    %v233 = vmul.f32 %v193, %v226
    %v234 = vmul.f32 %v194, %v226
    %v235 = vmul.f32 %v195, %v226
    %v236 = vld [vmem:[%s3] sm:$0x1]
    %v238 = vlaneseq
    %v239 = vshrl.u32 %v238, 7
    %v240 = vsub.s32 0, %v239
    %v241 = vrot.slane %v236, %v240
    %v243 = vadd.f32 %v228, %v241
    %v244 = vadd.f32 %v229, %v241
    %v245 = vadd.f32 %v230, %v241
    %v246 = vadd.f32 %v231, %v241
    %v247 = vadd.f32 %v232, %v241
    %v248 = vadd.f32 %v233, %v241
    %v249 = vadd.f32 %v234, %v241
    %v250 = vadd.f32 %v235, %v241
    %251 = vst [vmem:[#allocation2] sm:$0xff] %v243
    %252 = vst [vmem:[#allocation2 + $0x8] sm:$0xff] %v244
    %253 = vst [vmem:[#allocation2 + $0x10] sm:$0xff] %v245
    %254 = vst [vmem:[#allocation2 + $0x18] sm:$0xff] %v246
    %255 = vst [vmem:[#allocation2 + $0x20] sm:$0xff] %v247
    %256 = vst [vmem:[#allocation2 + $0x28] sm:$0xff] %v248
    %257 = vst [vmem:[#allocation2 + $0x30] sm:$0xff] %v249
    %258 = vst [vmem:[#allocation2 + $0x38] sm:$0xff] %v250
    %v259 = vld [vmem:[%s4] sm:$0xff]
    %v260 = vld [vmem:[%s4 + $0x8] sm:$0xff]
    %v261 = vld [vmem:[%s4 + $0x10] sm:$0xff]
    %v262 = vld [vmem:[%s4 + $0x18] sm:$0xff]
    %v263 = vld [vmem:[%s4 + $0x20] sm:$0xff]
    %v264 = vld [vmem:[%s4 + $0x28] sm:$0xff]
    %v265 = vld [vmem:[%s4 + $0x30] sm:$0xff]
    %v266 = vld [vmem:[%s4 + $0x38] sm:$0xff]
    %v267 = vld [vmem:[%s4 + $0x40] sm:$0xff]
    %v268 = vld [vmem:[%s4 + $0x48] sm:$0xff]
    %v269 = vld [vmem:[%s4 + $0x50] sm:$0xff]
    %v270 = vld [vmem:[%s4 + $0x58] sm:$0xff]
    %v271 = vld [vmem:[%s4 + $0x60] sm:$0xff]
    %v272 = vld [vmem:[%s4 + $0x68] sm:$0xff]
    %v273 = vld [vmem:[%s4 + $0x70] sm:$0xff]
    %v274 = vld [vmem:[%s4 + $0x78] sm:$0xff]
    %v275 = vld [vmem:[%s5] sm:$0xff]
    %vm276 = vcmask 64512
    %v278 = vsel %vm276, %v259, 0
    %v281 = vsel %vm276, %v260, 0
    %v284 = vsel %vm276, %v261, 0
    %v287 = vsel %vm276, %v262, 0
    %v290 = vsel %vm276, %v263, 0
    %v293 = vsel %vm276, %v264, 0
    %v296 = vsel %vm276, %v265, 0
    %v299 = vsel %vm276, %v266, 0
    %v302 = vsel %vm276, %v267, 0
    %v305 = vsel %vm276, %v268, 0
    %v308 = vsel %vm276, %v269, 0
    %v311 = vsel %vm276, %v270, 0
    %v314 = vsel %vm276, %v271, 0
    %v317 = vsel %vm276, %v272, 0
    %v320 = vsel %vm276, %v273, 0
    %v323 = vsel %vm276, %v274, 0
    %325 = vmatprep.subr.mxu0 0.0
    %326 = vmatpush1.msra.mxu0 0.0
    %327 = vmatprep.subr.mxu0 0.0
    %328 = vmatpush1.msra.mxu0 0.0
    %329 = vmatprep.subr.mxu0 0.0
    %330 = vmatpush1.msra.mxu0 0.0
    %331 = vmatprep.subr.mxu0 0.0
    %332 = vmatpush1.msra.mxu0 0.0
    %333 = vmatprep.subr.mxu0 0.0
    %334 = vmatpush1.msra.mxu0 0.0
    %335 = vmatprep.subr.mxu0 0.0
    %336 = vmatpush1.msra.mxu0 0.0
    %337 = vmatprep.subr.mxu0 0.0
    %338 = vmatpush1.msra.mxu0 0.0
    %339 = vmatprep.subr.mxu0 0.0
    %340 = vmatpush1.msra.mxu0 0.0
    %341 = vmatprep.subr.mxu0 0.0
    %342 = vmatpush1.msra.mxu0 0.0
    %343 = vmatprep.subr.mxu0 0.0
    %344 = vmatpush1.msra.mxu0 0.0
    %345 = vmatprep.subr.mxu0 0.0
    %346 = vmatpush1.msra.mxu0 0.0
    %347 = vmatprep.subr.mxu0 0.0
    %348 = vmatpush1.msra.mxu0 0.0
    %349 = vmatprep.subr.mxu0 0.0
    %350 = vmatpush1.msra.mxu0 0.0
    %351 = vmatprep.subr.mxu0 0.0
    %352 = vmatpush1.msra.mxu0 0.0
    %353 = vmatprep.subr.mxu0 0.0
    %354 = vmatpush1.msra.mxu0 0.0
    %355 = vmatprep.subr.mxu0 0.0
    %356 = vmatpush1.msra.mxu0 %v275
    %357 = vmatprep.subr.mxu0 0.0
    %358 = vmatpush2.msra.mxu0 0.0
    %359 = vmatprep.subr.mxu0 0.0
    %360 = vmatpush2.msra.mxu0 0.0
    %361 = vmatprep.subr.mxu0 0.0
    %362 = vmatpush2.msra.mxu0 0.0
    %363 = vmatprep.subr.mxu0 0.0
    %364 = vmatpush2.msra.mxu0 0.0
    %365 = vmatprep.subr.mxu0 0.0
    %366 = vmatpush2.msra.mxu0 0.0
    %367 = vmatprep.subr.mxu0 0.0
    %368 = vmatpush2.msra.mxu0 0.0
    %369 = vmatprep.subr.mxu0 0.0
    %370 = vmatpush2.msra.mxu0 0.0
    %371 = vmatprep.subr.mxu0 0.0
    %372 = vmatpush2.msra.mxu0 0.0
    %373 = vmatprep.subr.mxu0 0.0
    %374 = vmatpush2.msra.mxu0 0.0
    %375 = vmatprep.subr.mxu0 0.0
    %376 = vmatpush2.msra.mxu0 0.0
    %377 = vmatprep.subr.mxu0 0.0
    %378 = vmatpush2.msra.mxu0 0.0
    %379 = vmatprep.subr.mxu0 0.0
    %380 = vmatpush2.msra.mxu0 0.0
    %381 = vmatprep.subr.mxu0 0.0
    %382 = vmatpush2.msra.mxu0 0.0
    %383 = vmatprep.subr.mxu0 0.0
    %384 = vmatpush2.msra.mxu0 0.0
    %385 = vmatprep.subr.mxu0 0.0
    %386 = vmatpush2.msra.mxu0 0.0
    %387 = vmatprep.subr.mxu0 0.0
    %388 = vmatpush2.msra.mxu0 0.0
    %389 = vmatprep.mubr.f32.mxu0 0.0
    %390 = vmatmul.mubr.f32.gmra.mxu0 %v278
    %v391 = vpop.f32.mrf.mxu0
    %v392 = vadd.f32 0.0, %v391
    %v393 = vpop.f32.mrf.mxu0
    %394 = vmatprep.mubr.f32.mxu0 0.0
    %395 = vmatmul.mubr.f32.gmra.mxu0 %v281
    %v396 = vpop.f32.mrf.mxu0
    %v397 = vadd.f32 0.0, %v396
    %v398 = vpop.f32.mrf.mxu0
    %399 = vmatprep.mubr.f32.mxu0 0.0
    %400 = vmatmul.mubr.f32.gmra.mxu0 %v284
    %v401 = vpop.f32.mrf.mxu0
    %v402 = vadd.f32 0.0, %v401
    %v403 = vpop.f32.mrf.mxu0
    %404 = vmatprep.mubr.f32.mxu0 0.0
    %405 = vmatmul.mubr.f32.gmra.mxu0 %v287
    %v406 = vpop.f32.mrf.mxu0
    %v407 = vadd.f32 0.0, %v406
    %v408 = vpop.f32.mrf.mxu0
    %409 = vmatprep.mubr.f32.mxu0 0.0
    %410 = vmatmul.mubr.f32.gmra.mxu0 %v290
    %v411 = vpop.f32.mrf.mxu0
    %v412 = vadd.f32 0.0, %v411
    %v413 = vpop.f32.mrf.mxu0
    %414 = vmatprep.mubr.f32.mxu0 0.0
    %415 = vmatmul.mubr.f32.gmra.mxu0 %v293
    %v416 = vpop.f32.mrf.mxu0
    %v417 = vadd.f32 0.0, %v416
    %v418 = vpop.f32.mrf.mxu0
    %419 = vmatprep.mubr.f32.mxu0 0.0
    %420 = vmatmul.mubr.f32.gmra.mxu0 %v296
    %v421 = vpop.f32.mrf.mxu0
    %v422 = vadd.f32 0.0, %v421
    %v423 = vpop.f32.mrf.mxu0
    %424 = vmatprep.mubr.f32.mxu0 0.0
    %425 = vmatmul.mubr.f32.gmra.mxu0 %v299
    %v426 = vpop.f32.mrf.mxu0
    %v427 = vadd.f32 0.0, %v426
    %v428 = vpop.f32.mrf.mxu0
    %429 = vmatprep.mubr.f32.mxu0 0.0
    %430 = vmatmul.mubr.f32.gmra.mxu0 %v302
    %v431 = vpop.f32.mrf.mxu0
    %v432 = vadd.f32 0.0, %v431
    %v433 = vpop.f32.mrf.mxu0
    %434 = vmatprep.mubr.f32.mxu0 0.0
    %435 = vmatmul.mubr.f32.gmra.mxu0 %v305
    %v436 = vpop.f32.mrf.mxu0
    %v437 = vadd.f32 0.0, %v436
    %v438 = vpop.f32.mrf.mxu0
    %439 = vmatprep.mubr.f32.mxu0 0.0
    %440 = vmatmul.mubr.f32.gmra.mxu0 %v308
    %v441 = vpop.f32.mrf.mxu0
    %v442 = vadd.f32 0.0, %v441
    %v443 = vpop.f32.mrf.mxu0
    %444 = vmatprep.mubr.f32.mxu0 0.0
    %445 = vmatmul.mubr.f32.gmra.mxu0 %v311
    %v446 = vpop.f32.mrf.mxu0
    %v447 = vadd.f32 0.0, %v446
    %v448 = vpop.f32.mrf.mxu0
    %449 = vmatprep.mubr.f32.mxu0 0.0
    %450 = vmatmul.mubr.f32.gmra.mxu0 %v314
    %v451 = vpop.f32.mrf.mxu0
    %v452 = vadd.f32 0.0, %v451
    %v453 = vpop.f32.mrf.mxu0
    %454 = vmatprep.mubr.f32.mxu0 0.0
    %455 = vmatmul.mubr.f32.gmra.mxu0 %v317
    %v456 = vpop.f32.mrf.mxu0
    %v457 = vadd.f32 0.0, %v456
    %v458 = vpop.f32.mrf.mxu0
    %459 = vmatprep.mubr.f32.mxu0 0.0
    %460 = vmatmul.mubr.f32.gmra.mxu0 %v320
    %v461 = vpop.f32.mrf.mxu0
    %v462 = vadd.f32 0.0, %v461
    %v463 = vpop.f32.mrf.mxu0
    %464 = vmatprep.mubr.f32.mxu0 0.0
    %465 = vmatmul.mubr.f32.gmra.mxu0 %v323
    %v466 = vpop.f32.mrf.mxu0
    %v467 = vadd.f32 0.0, %v466
    %v468 = vpop.f32.mrf.mxu0
    %469 = vdwg.mxu0
    %v470 = vadd.f32 %v392, %v397
    %v471 = vadd.f32 %v470, %v402
    %v472 = vadd.f32 %v471, %v407
    %v473 = vadd.f32 %v472, %v412
    %v474 = vadd.f32 %v473, %v417
    %v475 = vadd.f32 %v474, %v422
    %v476 = vadd.f32 %v475, %v427
    %v477 = vadd.f32 %v476, %v432
    %v478 = vadd.f32 %v477, %v437
    %v479 = vadd.f32 %v478, %v442
    %v480 = vadd.f32 %v479, %v447
    %v481 = vadd.f32 %v480, %v452
    %v482 = vadd.f32 %v481, %v457
    %v483 = vadd.f32 %v482, %v462
    %v484 = vadd.f32 %v483, %v467
    %v485 = vrot.slane %v484, 4
    %v486 = vadd.f32 %v484, %v485
    %v487 = vrot.slane %v486, 2
    %v488 = vadd.f32 %v486, %v487
    %v489 = vrot.slane %v488, 1
    %v490 = vadd.f32 %v488, %v489
    %v491 = vrcp.pop 128.0
    %v492 = vmul.f32 %v490, %v491
    %v493 = vsub.f32 %v392, %v492
    %v494 = vsub.f32 %v397, %v492
    %v495 = vsub.f32 %v402, %v492
    %v496 = vsub.f32 %v407, %v492
    %v497 = vsub.f32 %v412, %v492
    %v498 = vsub.f32 %v417, %v492
    %v499 = vsub.f32 %v422, %v492
    %v500 = vsub.f32 %v427, %v492
    %v501 = vsub.f32 %v432, %v492
    %v502 = vsub.f32 %v437, %v492
    %v503 = vsub.f32 %v442, %v492
    %v504 = vsub.f32 %v447, %v492
    %v505 = vsub.f32 %v452, %v492
    %v506 = vsub.f32 %v457, %v492
    %v507 = vsub.f32 %v462, %v492
    %v508 = vsub.f32 %v467, %v492
    %v509 = vmul.f32 %v493, %v493
    %v510 = vmul.f32 %v494, %v494
    %v511 = vmul.f32 %v495, %v495
    %v512 = vmul.f32 %v496, %v496
    %v513 = vmul.f32 %v497, %v497
    %v514 = vmul.f32 %v498, %v498
    %v515 = vmul.f32 %v499, %v499
    %v516 = vmul.f32 %v500, %v500
    %v517 = vmul.f32 %v501, %v501
    %v518 = vmul.f32 %v502, %v502
    %v519 = vmul.f32 %v503, %v503
    %v520 = vmul.f32 %v504, %v504
    %v521 = vmul.f32 %v505, %v505
    %v522 = vmul.f32 %v506, %v506
    %v523 = vmul.f32 %v507, %v507
    %v524 = vmul.f32 %v508, %v508
    %v525 = vadd.f32 %v509, %v510
    %v526 = vadd.f32 %v525, %v511
    %v527 = vadd.f32 %v526, %v512
    %v528 = vadd.f32 %v527, %v513
    %v529 = vadd.f32 %v528, %v514
    %v530 = vadd.f32 %v529, %v515
    %v531 = vadd.f32 %v530, %v516
    %v532 = vadd.f32 %v531, %v517
    %v533 = vadd.f32 %v532, %v518
    %v534 = vadd.f32 %v533, %v519
    %v535 = vadd.f32 %v534, %v520
    %v536 = vadd.f32 %v535, %v521
    %v537 = vadd.f32 %v536, %v522
    %v538 = vadd.f32 %v537, %v523
    %v539 = vadd.f32 %v538, %v524
    %v540 = vrot.slane %v539, 4
    %v541 = vadd.f32 %v539, %v540
    %v542 = vrot.slane %v541, 2
    %v543 = vadd.f32 %v541, %v542
    %v544 = vrot.slane %v543, 1
    %v545 = vadd.f32 %v543, %v544
    %v546 = vmul.f32 %v545, %v491
    %v547 = vld [vmem:[%s6] sm:$0x1]
    %v548 = vadd.f32 %v546, 1e-05
    %v549 = vrsqrt.pop %v548
    %v550 = vmul.f32 %v547, %v549
    %v552 = vlaneseq
    %v553 = vshrl.u32 %v552, 7
    %v554 = vsub.s32 0, %v553
    %v555 = vrot.slane %v550, %v554
    %v557 = vmul.f32 %v493, %v555
    %v558 = vmul.f32 %v494, %v555
    %v559 = vmul.f32 %v495, %v555
    %v560 = vmul.f32 %v496, %v555
    %v561 = vmul.f32 %v497, %v555
    %v562 = vmul.f32 %v498, %v555
    %v563 = vmul.f32 %v499, %v555
    %v564 = vmul.f32 %v500, %v555
    %v565 = vmul.f32 %v501, %v555
    %v566 = vmul.f32 %v502, %v555
    %v567 = vmul.f32 %v503, %v555
    %v568 = vmul.f32 %v504, %v555
    %v569 = vmul.f32 %v505, %v555
    %v570 = vmul.f32 %v506, %v555
    %v571 = vmul.f32 %v507, %v555
    %v572 = vmul.f32 %v508, %v555
    %v573 = vld [vmem:[%s7] sm:$0x1]
    %v575 = vlaneseq
    %v576 = vshrl.u32 %v575, 7
    %v577 = vsub.s32 0, %v576
    %v578 = vrot.slane %v573, %v577
    %v580 = vadd.f32 %v557, %v578
    %v581 = vadd.f32 %v558, %v578
    %v582 = vadd.f32 %v559, %v578
    %v583 = vadd.f32 %v560, %v578
    %v584 = vadd.f32 %v561, %v578
    %v585 = vadd.f32 %v562, %v578
    %v586 = vadd.f32 %v563, %v578
    %v587 = vadd.f32 %v564, %v578
    %v588 = vadd.f32 %v565, %v578
    %v589 = vadd.f32 %v566, %v578
    %v590 = vadd.f32 %v567, %v578
    %v591 = vadd.f32 %v568, %v578
    %v592 = vadd.f32 %v569, %v578
    %v593 = vadd.f32 %v570, %v578
    %v594 = vadd.f32 %v571, %v578
    %v595 = vadd.f32 %v572, %v578
    %596 = vst [vmem:[#allocation4] sm:$0xff] %v580
    %597 = vst [vmem:[#allocation4 + $0x8] sm:$0xff] %v581
    %598 = vst [vmem:[#allocation4 + $0x10] sm:$0xff] %v582
    %599 = vst [vmem:[#allocation4 + $0x18] sm:$0xff] %v583
    %600 = vst [vmem:[#allocation4 + $0x20] sm:$0xff] %v584
    %601 = vst [vmem:[#allocation4 + $0x28] sm:$0xff] %v585
    %602 = vst [vmem:[#allocation4 + $0x30] sm:$0xff] %v586
    %603 = vst [vmem:[#allocation4 + $0x38] sm:$0xff] %v587
    %604 = vst [vmem:[#allocation4 + $0x40] sm:$0xff] %v588
    %605 = vst [vmem:[#allocation4 + $0x48] sm:$0xff] %v589
    %606 = vst [vmem:[#allocation4 + $0x50] sm:$0xff] %v590
    %607 = vst [vmem:[#allocation4 + $0x58] sm:$0xff] %v591
    %608 = vst [vmem:[#allocation4 + $0x60] sm:$0xff] %v592
    %609 = vst [vmem:[#allocation4 + $0x68] sm:$0xff] %v593
    %610 = vst [vmem:[#allocation4 + $0x70] sm:$0xff] %v594
    %611 = vst [vmem:[#allocation4 + $0x78] sm:$0xff] %v595
    // Predicated region
    $region34: #{tpu_custom_call.1} parent=1 // pred_check
      _
    $region35: #{tpu_custom_call.1} parent=1 // pred_check_branch
      %613 = sbr.rel (0) target = $region37
    $region36: #{tpu_custom_call.1} parent=1 // pred_region
      %s615 = ssub.s32 1024, 1024
      %616 = vsyncadd [#allocation3], %s615
      %s617 = sshll.u32 [#allocation2], 4
      %s618 = int_to_ptr.vmem [resolvable:$true] %s617
      %623 = dma.vmem_to_hbm [thread:$0]  %s618, 1024, %s8, [#allocation3], 128, 128, 8
    $region37: #{tpu_custom_call.1} parent=1 // pred_fallthru
      _
    // Predicated region
    $region38: #{tpu_custom_call.1} parent=1 // pred_check
      _
    $region39: #{tpu_custom_call.1} parent=1 // pred_check_branch
      %625 = sbr.rel (0) target = $region41
    $region40: #{tpu_custom_call.1} parent=1 // pred_region
      %s627 = ssub.s32 2048, 2048
      %628 = vsyncadd [#allocation5], %s627
      %s629 = sshll.u32 [#allocation4], 4
      %s630 = int_to_ptr.vmem [resolvable:$true] %s629
      %635 = dma.vmem_to_hbm [thread:$0]  %s630, 2048, %s9, [#allocation5], 128, 128, 8
    $region41: #{tpu_custom_call.1} parent=1 // pred_fallthru
      _
    // Predicated region
    $region42: #{tpu_custom_call.1} parent=1 // pred_check
      _
    $region43: #{tpu_custom_call.1} parent=1 // pred_check_branch
      %637 = sbr.rel (0) target = $region45
    $region44: #{tpu_custom_call.1} parent=1 // pred_region
      %638 = dma.done [#allocation3], 1024
    $region45: #{tpu_custom_call.1} parent=1 // pred_fallthru
      _
    // Predicated region
    $region46: #{tpu_custom_call.1} parent=1 // pred_check
      _
    $region47: #{tpu_custom_call.1} parent=1 // pred_check_branch
      %640 = sbr.rel (0) target = $region49
    $region48: #{tpu_custom_call.1} parent=1 // pred_region
      %641 = dma.done [#allocation5], 2048
    $region49: #{tpu_custom_call.1} parent=1 // pred_fallthru
      _
    %642 = vsyncpa [#allocation3], 1
    %643 = vsyncpa [#allocation5], 1

</llo_original>
